<compile_context>
chip_gen: v7x
topology: tpu7x:2x2x1
jax: 0.10.0
libtpu: 0.0.40
codegen_flags: <defaults>
</compile_context>

<pallas_src>
import jax
import jax.numpy as jnp
from jax import lax
from jax.experimental import pallas as pl
from jax.experimental.pallas import tpu as pltpu

EPS = 1e-5
_SQRT_2_OVER_PI = 0.7978845608028654
_GELU_C = 0.044715


def _make_fused_kernel(m_true):
    """conv(+bias) -> relu -> batch stats -> BN normalize -> tanh-GELU tail."""

    def kernel(p_ref, w_ref, prm_ref, o_ref):
        prm = prm_ref[...]                      # (Cout, 3): bias | gamma | beta
        bias = prm[:, 0:1]
        gamma = prm[:, 1:2]
        beta = prm[:, 2:3]

        # conv as a small (Cout, K) x (K, m_pad) MXU matmul, then bias + ReLU
        v1 = jnp.dot(w_ref[...], p_ref[...],
                     preferred_element_type=jnp.float32) + bias      # (Cout, m_pad)
        v2 = jnp.maximum(v1, 0.0)

        # Batch statistics over the true M columns only (padded columns of the
        # zero-padded patch slab produce relu(bias) and must not contribute).
        col = lax.broadcasted_iota(jnp.int32, v2.shape, 1)
        v2m = jnp.where(col < m_true, v2, 0.0)

        inv_m = jnp.float32(1.0 / m_true)
        mean = jnp.sum(v2m, axis=1, keepdims=True) * inv_m           # (Cout, 1)
        ex2 = jnp.sum(v2m * v2m, axis=1, keepdims=True) * inv_m      # (Cout, 1)
        var = jnp.maximum(ex2 - mean * mean, 0.0)   # biased var (BN training)
        scale = lax.rsqrt(var + EPS) * gamma
        shift = beta - mean * scale

        v3 = v2 * scale + shift

        # tanh-GELU tail (algebra simplified; tanh rides the EUP slot)
        inner = (v3 * (1.0 + _GELU_C * (v3 * v3))) * _SQRT_2_OVER_PI
        o_ref[...] = (0.5 * v3) * (jnp.tanh(inner) + 1.0)

    return kernel


def model_forward(x_nchw, w_oihw, bias, gamma, beta):
    """x_nchw: (N, Cin, H, W) float32. Returns (N, Cout, Ho, Wo) float32."""
    N, Cin, H, W = x_nchw.shape
    Cout, _, KH, KW = w_oihw.shape
    Ho, Wo = H - KH + 1, W - KW + 1
    M = N * Ho * Wo
    K = Cin * KH * KW

    m_pad = ((M + 127) // 128) * 128   # lane-dense output -> unmasked vst

    # ---- layout glue: build patches directly in the lane-dense (K, M) layout.
    # K is ordered (cin, kh, kw) so the weight is a plain reshape of OIHW. ----
    shifted = jnp.stack(
        [x_nchw[:, :, kh:kh + Ho, kw:kw + Wo]
         for kh in range(KH) for kw in range(KW)],
        axis=2)                                           # (N, Cin, KH*KW, Ho, Wo)
    patches_t = shifted.transpose(1, 2, 0, 3, 4).reshape(K, M).astype(jnp.float32)
    patches_t = jnp.pad(patches_t, ((0, 0), (0, m_pad - M)))          # (K, m_pad)

    w_t = w_oihw.reshape(Cout, K).astype(jnp.float32)     # (Cout, Cin*KH*KW)

    # merged per-channel params: col 0 = conv bias, 1 = bn gamma, 2 = bn beta
    params = jnp.stack([bias, gamma, beta], axis=1).astype(jnp.float32)  # (Cout, 3)

    out_t = pl.pallas_call(
        _make_fused_kernel(M),
        out_shape=jax.ShapeDtypeStruct((Cout, m_pad), jnp.float32),
        grid_spec=pltpu.PrefetchScalarGridSpec(
            num_scalar_prefetch=0,
            grid=(1,),
            in_specs=[pl.BlockSpec((K, m_pad), lambda i: (0, 0)),
                      pl.BlockSpec((Cout, K), lambda i: (0, 0)),
                      pl.BlockSpec((Cout, 3), lambda i: (0, 0))],
            out_specs=pl.BlockSpec((Cout, m_pad), lambda i: (0, 0)),
        ),
        compiler_params=pltpu.CompilerParams(
            dimension_semantics=("arbitrary",)),
        cost_estimate=pl.CostEstimate(
            flops=2 * Cout * K * m_pad + 24 * Cout * m_pad,
            transcendentals=Cout * m_pad,
            bytes_accessed=4 * (K * m_pad + Cout * m_pad + Cout * K + Cout * 3)),
    )(patches_t, w_t, params)

    # ---- layout glue: (Cout, M) -> NCHW ----
    out_nchw = out_t[:, :M].reshape(Cout, N, Ho, Wo).transpose(1, 0, 2, 3)
    return out_nchw


def _reference(x_nchw, w_oihw, bias, gamma, beta):
    """Pure-JAX reference (independent conv path) for a sanity check."""
    v1 = lax.conv_general_dilated(
        x_nchw, w_oihw, window_strides=(1, 1), padding="VALID",
        dimension_numbers=("NCHW", "OIHW", "NCHW"),
    ) + bias.reshape(1, -1, 1, 1)
    v2 = jnp.maximum(v1, 0.0)
    mean = jnp.mean(v2, axis=(0, 2, 3), keepdims=True)
    var = jnp.mean((v2 - mean) ** 2, axis=(0, 2, 3), keepdims=True)
    v3 = (v2 - mean) * lax.rsqrt(var + EPS) * gamma.reshape(1, -1, 1, 1) \
         + beta.reshape(1, -1, 1, 1)
    v4 = v3 * 0.5
    v7 = v3 * v3 * v3 * _GELU_C
    v9 = (v3 + v7) * _SQRT_2_OVER_PI
    return v4 * (jnp.tanh(v9) + 1.0)


if __name__ == "__main__":
    key = jax.random.PRNGKey(0)
    kx, kw, kb = jax.random.split(key, 3)

    # small shapes consistent with the module (Conv2d(4, 8, 2))
    N, Cin, H, W = 2, 4, 16, 16
    Cout, KH, KW = 8, 2, 2

    x = jax.random.normal(kx, (N, Cin, H, W), dtype=jnp.float32)
    conv_w = jax.random.normal(kw, (Cout, Cin, KH, KW), dtype=jnp.float32) * 0.1
    conv_b = jax.random.normal(kb, (Cout,), dtype=jnp.float32) * 0.1
    bn_gamma = jnp.ones((Cout,), dtype=jnp.float32)   # PyTorch default init
    bn_beta = jnp.zeros((Cout,), dtype=jnp.float32)   # PyTorch default init

    out = model_forward(x, conv_w, conv_b, bn_gamma, bn_beta)
    out = jax.block_until_ready(out)

    ref = _reference(x, conv_w, conv_b, bn_gamma, bn_beta)
    assert out.shape == (N, Cout, H - KH + 1, W - KW + 1), out.shape
    err = jnp.max(jnp.abs(out - ref))
    assert jnp.allclose(out, ref, rtol=1e-3, atol=1e-3), f"mismatch vs reference: {err}"

    print("KERNEL_OK")
</pallas_src>

<mosaic_0001>
module attributes {stable_mosaic.version = 11 : i64} {
  func.func @kernel(%arg0: i32, %arg1: memref<16x512xf32, #tpu.memory_space<vmem>>, %arg2: memref<8x16xf32, #tpu.memory_space<vmem>>, %arg3: memref<8x3xf32, #tpu.memory_space<vmem>>, %arg4: memref<8x512xf32, #tpu.memory_space<vmem>>) attributes {dimension_semantics = [#tpu.dimension_semantics<arbitrary>], iteration_bounds = array<i64: 1>, scalar_prefetch = 0 : i64, scratch_operands = 0 : i64, tpu.core_type = #tpu.core_type<tc>, window_params = [{pipeline_mode = #tpu.pipeline_mode<synchronous>, transform_indices = @transform_0, window_bounds = array<i64: 16, 512>}, {pipeline_mode = #tpu.pipeline_mode<synchronous>, transform_indices = @transform_1, window_bounds = array<i64: 8, 16>}, {pipeline_mode = #tpu.pipeline_mode<synchronous>, transform_indices = @transform_2, window_bounds = array<i64: 8, 3>}, {pipeline_mode = #tpu.pipeline_mode<synchronous>, transform_indices = @transform_3, window_bounds = array<i64: 8, 512>}]} {
    %c0 = arith.constant 0 : index
    %c0_0 = arith.constant 0 : index
    %0 = vector.load %arg3[%c0, %c0_0] : memref<8x3xf32, #tpu.memory_space<vmem>>, vector<8x3xf32>
    %1 = vector.extract_strided_slice %0 {offsets = [0, 0], sizes = [8, 1], strides = [1, 1]} : vector<8x3xf32> to vector<8x1xf32>
    %2 = vector.extract_strided_slice %0 {offsets = [0, 1], sizes = [8, 1], strides = [1, 1]} : vector<8x3xf32> to vector<8x1xf32>
    %3 = vector.extract_strided_slice %0 {offsets = [0, 2], sizes = [8, 1], strides = [1, 1]} : vector<8x3xf32> to vector<8x1xf32>
    %c0_1 = arith.constant 0 : index
    %c0_2 = arith.constant 0 : index
    %4 = vector.load %arg2[%c0_1, %c0_2] : memref<8x16xf32, #tpu.memory_space<vmem>>, vector<8x16xf32>
    %c0_3 = arith.constant 0 : index
    %c0_4 = arith.constant 0 : index
    %5 = vector.load %arg1[%c0_3, %c0_4] : memref<16x512xf32, #tpu.memory_space<vmem>>, vector<16x512xf32>
    %cst = arith.constant dense<0.000000e+00> : vector<8x512xf32>
    %6 = tpu.matmul %4, %5, %cst {dimension_numbers = #tpu.dot_dimension_numbers<[1], [0], [0], [1], [0, 0, 1, 1], [], []>} : vector<8x16xf32>, vector<16x512xf32>, vector<8x512xf32> -> vector<8x512xf32>
    %7 = vector.broadcast %1 : vector<8x1xf32> to vector<8x512xf32>
    %8 = arith.addf %6, %7 : vector<8x512xf32>
    %cst_5 = arith.constant 0.000000e+00 : f32
    %9 = vector.broadcast %cst_5 : f32 to vector<8x512xf32>
    %10 = arith.maximumf %8, %9 : vector<8x512xf32>
    %11 = tpu.iota {dimensions = array<i32: 1>} : vector<8x512xi32>
    %c450_i32 = arith.constant 450 : i32
    %12 = vector.broadcast %c450_i32 : i32 to vector<8x512xi32>
    %13 = arith.cmpi slt, %11, %12 : vector<8x512xi32>
    %cst_6 = arith.constant 0.000000e+00 : f32
    %14 = vector.broadcast %cst_6 : f32 to vector<8x512xf32>
    %15 = arith.select %13, %10, %14 : vector<8x512xi1>, vector<8x512xf32>
    %cst_7 = arith.constant dense<0.000000e+00> : vector<8xf32>
    %16 = vector.multi_reduction <add>, %15, %cst_7 [1] : vector<8x512xf32> to vector<8xf32>
    %17 = vector.shape_cast %16 : vector<8xf32> to vector<8x1xf32>
    %cst_8 = arith.constant 0.00222222228 : f32
    %18 = vector.broadcast %cst_8 : f32 to vector<8x1xf32>
    %19 = arith.mulf %17, %18 : vector<8x1xf32>
    %20 = arith.mulf %15, %15 : vector<8x512xf32>
    %cst_9 = arith.constant dense<0.000000e+00> : vector<8xf32>
    %21 = vector.multi_reduction <add>, %20, %cst_9 [1] : vector<8x512xf32> to vector<8xf32>
    %22 = vector.shape_cast %21 : vector<8xf32> to vector<8x1xf32>
    %cst_10 = arith.constant 0.00222222228 : f32
    %23 = vector.broadcast %cst_10 : f32 to vector<8x1xf32>
    %24 = arith.mulf %22, %23 : vector<8x1xf32>
    %25 = arith.mulf %19, %19 : vector<8x1xf32>
    %26 = arith.subf %24, %25 : vector<8x1xf32>
    %cst_11 = arith.constant 0.000000e+00 : f32
    %27 = vector.broadcast %cst_11 : f32 to vector<8x1xf32>
    %28 = arith.maximumf %26, %27 : vector<8x1xf32>
    %cst_12 = arith.constant 9.99999974E-6 : f32
    %29 = vector.broadcast %cst_12 : f32 to vector<8x1xf32>
    %30 = arith.addf %28, %29 : vector<8x1xf32>
    %31 = math.rsqrt %30 : vector<8x1xf32>
    %32 = arith.mulf %31, %2 : vector<8x1xf32>
    %33 = arith.mulf %19, %32 : vector<8x1xf32>
    %34 = arith.subf %3, %33 : vector<8x1xf32>
    %35 = vector.broadcast %32 : vector<8x1xf32> to vector<8x512xf32>
    %36 = arith.mulf %10, %35 : vector<8x512xf32>
    %37 = vector.broadcast %34 : vector<8x1xf32> to vector<8x512xf32>
    %38 = arith.addf %36, %37 : vector<8x512xf32>
    %39 = arith.mulf %38, %38 : vector<8x512xf32>
    %cst_13 = arith.constant 4.471500e-02 : f32
    %40 = vector.broadcast %cst_13 : f32 to vector<8x512xf32>
    %41 = arith.mulf %40, %39 : vector<8x512xf32>
    %cst_14 = arith.constant 1.000000e+00 : f32
    %42 = vector.broadcast %cst_14 : f32 to vector<8x512xf32>
    %43 = arith.addf %42, %41 : vector<8x512xf32>
    %44 = arith.mulf %38, %43 : vector<8x512xf32>
    %cst_15 = arith.constant 0.797884583 : f32
    %45 = vector.broadcast %cst_15 : f32 to vector<8x512xf32>
    %46 = arith.mulf %44, %45 : vector<8x512xf32>
    %cst_16 = arith.constant 5.000000e-01 : f32
    %47 = vector.broadcast %cst_16 : f32 to vector<8x512xf32>
    %48 = arith.mulf %47, %38 : vector<8x512xf32>
    %49 = math.tanh %46 : vector<8x512xf32>
    %cst_17 = arith.constant 1.000000e+00 : f32
    %50 = vector.broadcast %cst_17 : f32 to vector<8x512xf32>
    %51 = arith.addf %49, %50 : vector<8x512xf32>
    %52 = arith.mulf %48, %51 : vector<8x512xf32>
    %c0_18 = arith.constant 0 : index
    %c0_19 = arith.constant 0 : index
    %53 = vector.load %arg4[%c0_18, %c0_19] : memref<8x512xf32, #tpu.memory_space<vmem>>, vector<8x512xf32>
    tpu.vector_store %arg4[%c0_18, %c0_19], %52 {strides = array<i32>} : memref<8x512xf32, #tpu.memory_space<vmem>>, vector<8x512xf32>,
    return
  }
  func.func @transform_0(%arg0: i32) -> (i32, i32) {
    %c0_i32 = arith.constant 0 : i32
    %c0_i32_0 = arith.constant 0 : i32
    %c0_i32_1 = arith.constant 0 : i32
    return %c0_i32, %c0_i32_0 : i32, i32
  }
  func.func @transform_1(%arg0: i32) -> (i32, i32) {
    %c0_i32 = arith.constant 0 : i32
    %c0_i32_0 = arith.constant 0 : i32
    %c0_i32_1 = arith.constant 0 : i32
    return %c0_i32, %c0_i32_0 : i32, i32
  }
  func.func @transform_2(%arg0: i32) -> (i32, i32) {
    %c0_i32 = arith.constant 0 : i32
    %c0_i32_0 = arith.constant 0 : i32
    %c0_i32_1 = arith.constant 0 : i32
    return %c0_i32, %c0_i32_0 : i32, i32
  }
  func.func @transform_3(%arg0: i32) -> (i32, i32) {
    %c0_i32 = arith.constant 0 : i32
    %c0_i32_0 = arith.constant 0 : i32
    %c0_i32_1 = arith.constant 0 : i32
    return %c0_i32, %c0_i32_0 : i32, i32
  }
}

</mosaic_0001>

<llo_original>
// kernel: tpu_custom_call.1
$region0: #{tpu_custom_call.1}
  #allocation0 [shape = 'u32[]', space=smem, size = 0x4, offset = 0x4, fixed_abs, tag = 'smem constant byte address 0x4 - core index']
  #allocation1 [shape = 'u32[144,128]{1,0:T(1,128)}', space=vmem, size = 0x12000, scoped, tag = 'internal scratch']
  %s0 = inlined_call_operand.hbm [shape: f32[16,512], index: 0, kind: input, shape index: {}]
  %s1 = inlined_call_operand.vmem [shape: f32[8,16], index: 1, kind: input, shape index: {}]
  %s2 = inlined_call_operand.vmem [shape: f32[8,3], index: 2, kind: input, shape index: {}]
  %s3 = inlined_call_operand.hbm [shape: f32[8,512], index: 3, kind: output, shape index: {}]
  %s4 = sld [smem:[#allocation0]]
  $region26: #{tpu_custom_call.1} parent=0
    _
  %s6 = ssub.s32 1, %s4
  %s7 = scalar_select 0, %s6, %s4
  $region1: #{tpu_custom_call.1} parent=0
    #allocation2 [shape = 'u8[32768]{0}', space=vmem, size = 0x8000, scoped, tag = 'input window, operand 0, single buffered']
    #allocation3 [shape = 's32[1]{0}', space=sflag, size = 0x4, scoped, tag = 'scoped memory for tpu_custom_call.1']
    #allocation4 [shape = 's32[1]{0}', space=sflag, size = 0x4, scoped, tag = 'scoped memory for tpu_custom_call.1']
    #allocation5 [shape = 'u8[16384]{0}', space=vmem, size = 0x4000, scoped, tag = 'output window, operand 0, single buffered']
    %8 = vsyncpa [#allocation3], 0
    %9 = vsyncpa [#allocation4], 0
    // Predicated region
    $region2: #{tpu_custom_call.1} parent=1 // pred_check
      _
    $region3: #{tpu_custom_call.1} parent=1 // pred_check_branch
      %11 = sbr.rel (0) target = $region5
    $region4: #{tpu_custom_call.1} parent=1 // pred_region
      %s13 = ssub.s32 1024, 1024
      %14 = vsyncadd [#allocation3], %s13
      %s15 = sshll.u32 [#allocation2], 4
      %s16 = int_to_ptr.vmem [resolvable:$true] %s15
      %21 = dma.hbm_to_vmem [thread:$0]  %s0, 1024, %s16, [#allocation3], 512, 512, 32
    $region5: #{tpu_custom_call.1} parent=1 // pred_fallthru
      _
    // Predicated region
    $region6: #{tpu_custom_call.1} parent=1 // pred_check
      _
    $region7: #{tpu_custom_call.1} parent=1 // pred_check_branch
      %23 = sbr.rel (0) target = $region9
    $region8: #{tpu_custom_call.1} parent=1 // pred_region
      _
    $region9: #{tpu_custom_call.1} parent=1 // pred_fallthru
      _
    // Predicated region
    $region10: #{tpu_custom_call.1} parent=1 // pred_check
      _
    $region11: #{tpu_custom_call.1} parent=1 // pred_check_branch
      %25 = sbr.rel (0) target = $region13
    $region12: #{tpu_custom_call.1} parent=1 // pred_region
      _
    $region13: #{tpu_custom_call.1} parent=1 // pred_fallthru
      _
    // Predicated region
    $region14: #{tpu_custom_call.1} parent=1 // pred_check
      _
    $region15: #{tpu_custom_call.1} parent=1 // pred_check_branch
      %27 = sbr.rel (0) target = $region17
    $region16: #{tpu_custom_call.1} parent=1 // pred_region
      %28 = dma.done [#allocation3], 1024
    $region17: #{tpu_custom_call.1} parent=1 // pred_fallthru
      _
    %v29 = vld [vmem:[%s2] sm:$0xff]
    %v30 = vld [vmem:[%s1] sm:$0xff]
    %v31 = vld [vmem:[#allocation2] sm:$0xff]
    %v32 = vld [vmem:[#allocation2 + $0x8] sm:$0xff]
    %v33 = vld [vmem:[#allocation2 + $0x10] sm:$0xff]
    %v34 = vld [vmem:[#allocation2 + $0x18] sm:$0xff]
    %v35 = vld [vmem:[#allocation2 + $0x20] sm:$0xff]
    %v36 = vld [vmem:[#allocation2 + $0x28] sm:$0xff]
    %v37 = vld [vmem:[#allocation2 + $0x30] sm:$0xff]
    %v38 = vld [vmem:[#allocation2 + $0x38] sm:$0xff]
    %40 = vset.pattern.permute.xlu0 0
    %41 = vperm.xlu0 %40, %v29
    %v42 = vpop.permute.xlu0 %41
    %vm44 = vcmask 130048
    %v46 = vsel %vm44, %v30, 0
    %48 = vmatprep.subr.mxu0 %v32
    %49 = vmatpush1.msra.mxu0 %v31
    %50 = vmatprep.subr.mxu0 %v36
    %51 = vmatpush1.msra.mxu0 %v35
    %52 = vmatprep.subr.mxu0 0.0
    %53 = vmatpush1.msra.mxu0 0.0
    %54 = vmatprep.subr.mxu0 0.0
    %55 = vmatpush1.msra.mxu0 0.0
    %56 = vmatprep.subr.mxu0 0.0
    %57 = vmatpush1.msra.mxu0 0.0
    %58 = vmatprep.subr.mxu0 0.0
    %59 = vmatpush1.msra.mxu0 0.0
    %60 = vmatprep.subr.mxu0 0.0
    %61 = vmatpush1.msra.mxu0 0.0
    %62 = vmatprep.subr.mxu0 0.0
    %63 = vmatpush1.msra.mxu0 0.0
    %64 = vmatprep.subr.mxu0 0.0
    %65 = vmatpush1.msra.mxu0 0.0
    %66 = vmatprep.subr.mxu0 0.0
    %67 = vmatpush1.msra.mxu0 0.0
    %68 = vmatprep.subr.mxu0 0.0
    %69 = vmatpush1.msra.mxu0 0.0
    %70 = vmatprep.subr.mxu0 0.0
    %71 = vmatpush1.msra.mxu0 0.0
    %72 = vmatprep.subr.mxu0 0.0
    %73 = vmatpush1.msra.mxu0 0.0
    %74 = vmatprep.subr.mxu0 0.0
    %75 = vmatpush1.msra.mxu0 0.0
    %76 = vmatprep.subr.mxu0 0.0
    %77 = vmatpush1.msra.mxu0 0.0
    %78 = vmatprep.subr.mxu0 0.0
    %79 = vmatpush1.msra.mxu0 0.0
    %80 = vmatprep.subr.mxu0 0.0
    %81 = vmatpush1.msra.mxu0 0.0
    %82 = vmatprep.subr.mxu0 0.0
    %83 = vmatpush1.msra.mxu0 0.0
    %84 = vmatprep.subr.mxu0 0.0
    %85 = vmatpush1.msra.mxu0 0.0
    %86 = vmatprep.subr.mxu0 0.0
    %87 = vmatpush1.msra.mxu0 0.0
    %88 = vmatprep.subr.mxu0 0.0
    %89 = vmatpush1.msra.mxu0 0.0
    %90 = vmatprep.subr.mxu0 0.0
    %91 = vmatpush1.msra.mxu0 0.0
    %92 = vmatprep.subr.mxu0 0.0
    %93 = vmatpush1.msra.mxu0 0.0
    %94 = vmatprep.subr.mxu0 0.0
    %95 = vmatpush1.msra.mxu0 0.0
    %96 = vmatprep.subr.mxu0 0.0
    %97 = vmatpush1.msra.mxu0 0.0
    %98 = vmatprep.subr.mxu0 0.0
    %99 = vmatpush1.msra.mxu0 0.0
    %100 = vmatprep.subr.mxu0 0.0
    %101 = vmatpush1.msra.mxu0 0.0
    %102 = vmatprep.subr.mxu0 0.0
    %103 = vmatpush1.msra.mxu0 0.0
    %104 = vmatprep.subr.mxu0 0.0
    %105 = vmatpush1.msra.mxu0 0.0
    %106 = vmatprep.subr.mxu0 0.0
    %107 = vmatpush1.msra.mxu0 0.0
    %108 = vmatprep.subr.mxu0 0.0
    %109 = vmatpush1.msra.mxu0 0.0
    %110 = vmatprep.subr.mxu0 0.0
    %111 = vmatpush1.msra.mxu0 0.0
    %112 = vmatprep.mubr.f32.mxu0 0.0
    %113 = vmatmul.mubr.f32.gmra.mrb[0].mxu0 %v46
    %v114 = vpop.f32.mrb[0].mxu0
    %v115 = vadd.f32 %v42, %v114
    %v116 = vpop.f32.mrb[0].mxu0
    %v117 = vadd.f32 %v42, %v116
    %118 = vdwg.mxu0
    %119 = vmatprep.subr.mxu0 %v34
    %120 = vmatpush1.msra.mxu0 %v33
    %121 = vmatprep.subr.mxu0 %v38
    %122 = vmatpush1.msra.mxu0 %v37
    %123 = vmatprep.subr.mxu0 0.0
    %124 = vmatpush1.msra.mxu0 0.0
    %125 = vmatprep.subr.mxu0 0.0
    %126 = vmatpush1.msra.mxu0 0.0
    %127 = vmatprep.subr.mxu0 0.0
    %128 = vmatpush1.msra.mxu0 0.0
    %129 = vmatprep.subr.mxu0 0.0
    %130 = vmatpush1.msra.mxu0 0.0
    %131 = vmatprep.subr.mxu0 0.0
    %132 = vmatpush1.msra.mxu0 0.0
    %133 = vmatprep.subr.mxu0 0.0
    %134 = vmatpush1.msra.mxu0 0.0
    %135 = vmatprep.subr.mxu0 0.0
    %136 = vmatpush1.msra.mxu0 0.0
    %137 = vmatprep.subr.mxu0 0.0
    %138 = vmatpush1.msra.mxu0 0.0
    %139 = vmatprep.subr.mxu0 0.0
    %140 = vmatpush1.msra.mxu0 0.0
    %141 = vmatprep.subr.mxu0 0.0
    %142 = vmatpush1.msra.mxu0 0.0
    %143 = vmatprep.subr.mxu0 0.0
    %144 = vmatpush1.msra.mxu0 0.0
    %145 = vmatprep.subr.mxu0 0.0
    %146 = vmatpush1.msra.mxu0 0.0
    %147 = vmatprep.subr.mxu0 0.0
    %148 = vmatpush1.msra.mxu0 0.0
    %149 = vmatprep.subr.mxu0 0.0
    %150 = vmatpush1.msra.mxu0 0.0
    %151 = vmatprep.subr.mxu0 0.0
    %152 = vmatpush1.msra.mxu0 0.0
    %153 = vmatprep.subr.mxu0 0.0
    %154 = vmatpush1.msra.mxu0 0.0
    %155 = vmatprep.subr.mxu0 0.0
    %156 = vmatpush1.msra.mxu0 0.0
    %157 = vmatprep.subr.mxu0 0.0
    %158 = vmatpush1.msra.mxu0 0.0
    %159 = vmatprep.subr.mxu0 0.0
    %160 = vmatpush1.msra.mxu0 0.0
    %161 = vmatprep.subr.mxu0 0.0
    %162 = vmatpush1.msra.mxu0 0.0
    %163 = vmatprep.subr.mxu0 0.0
    %164 = vmatpush1.msra.mxu0 0.0
    %165 = vmatprep.subr.mxu0 0.0
    %166 = vmatpush1.msra.mxu0 0.0
    %167 = vmatprep.subr.mxu0 0.0
    %168 = vmatpush1.msra.mxu0 0.0
    %169 = vmatprep.subr.mxu0 0.0
    %170 = vmatpush1.msra.mxu0 0.0
    %171 = vmatprep.subr.mxu0 0.0
    %172 = vmatpush1.msra.mxu0 0.0
    %173 = vmatprep.subr.mxu0 0.0
    %174 = vmatpush1.msra.mxu0 0.0
    %175 = vmatprep.subr.mxu0 0.0
    %176 = vmatpush1.msra.mxu0 0.0
    %177 = vmatprep.subr.mxu0 0.0
    %178 = vmatpush1.msra.mxu0 0.0
    %179 = vmatprep.subr.mxu0 0.0
    %180 = vmatpush1.msra.mxu0 0.0
    %181 = vmatprep.subr.mxu0 0.0
    %182 = vmatpush1.msra.mxu0 0.0
    %183 = vmatprep.mubr.f32.mxu0 0.0
    %184 = vmatmul.mubr.f32.gmra.mrb[0].mxu0 %v46
    %v185 = vpop.f32.mrb[0].mxu0
    %v186 = vadd.f32 %v42, %v185
    %v187 = vpop.f32.mrb[0].mxu0
    %v188 = vadd.f32 %v42, %v187
    %189 = vdwg.mxu0
    %v190 = vmax.f32 %v115, 0.0
    %v191 = vmax.f32 %v117, 0.0
    %v192 = vmax.f32 %v186, 0.0
    %v193 = vmax.f32 %v188, 0.0
    %v194 = vlaneseq
    %v195 = vand.u32 %v194, 127
    %v196 = vadd.s32 %v195, 128
    %v197 = vadd.s32 %v195, 256
    %v198 = vadd.s32 %v195, 384
    %vm199 = vcmp.lt.s32.totalorder %v195, 450
    %vm200 = vcmp.lt.s32.totalorder %v196, 450
    %vm201 = vcmp.lt.s32.totalorder %v197, 450
    %vm202 = vcmp.lt.s32.totalorder %v198, 450
    %v203 = vsel %vm199, %v190, 0.0
    %v204 = vsel %vm200, %v191, 0.0
    %v205 = vsel %vm201, %v192, 0.0
    %v206 = vsel %vm202, %v193, 0.0
    %v207 = vadd.f32 %v203, %v204
    %v208 = vadd.f32 %v207, %v205
    %v209 = vadd.f32 %v208, %v206
    %210 = vadd.xlane.f32.xlu0 %v209
    %v211 = vpop.xlane.xlu0 %210
    %v212 = vmul.f32 %v211, 0.0022222223
    %v213 = vmul.f32 %v203, %v203
    %v214 = vmul.f32 %v204, %v204
    %v215 = vmul.f32 %v205, %v205
    %v216 = vmul.f32 %v206, %v206
    %v217 = vadd.f32 %v213, %v214
    %v218 = vadd.f32 %v217, %v215
    %v219 = vadd.f32 %v218, %v216
    %220 = vadd.xlane.f32.xlu0 %v219
    %v221 = vpop.xlane.xlu0 %220
    %v222 = vmul.f32 %v221, 0.0022222223
    %v223 = vmul.f32 %v212, %v212
    %v224 = vsub.f32 %v222, %v223
    %v225 = vmax.f32 %v224, 0.0
    %v226 = vadd.f32 %v225, 1e-05
    %v227 = vrsqrt.pop %v226
    %v228 = vmul.f32 %v227, %v29
    %v229 = vmul.f32 %v212, %v228
    %231 = vrot.lane.b32.xlu0 %v229, 1
    %v232 = vpop.permute.xlu0 %231
    %v234 = vsub.f32 %v29, %v232
    %236 = vset.pattern.permute.xlu0 1
    %237 = vperm.xlu0 %236, %v228
    %v238 = vpop.permute.xlu0 %237
    %v240 = vmul.f32 %v190, %v238
    %v241 = vmul.f32 %v191, %v238
    %v242 = vmul.f32 %v192, %v238
    %v243 = vmul.f32 %v193, %v238
    %245 = vset.pattern.permute.xlu0 2
    %246 = vperm.xlu0 %245, %v234
    %v247 = vpop.permute.xlu0 %246
    %v249 = vadd.f32 %v240, %v247
    %v250 = vadd.f32 %v241, %v247
    %v251 = vadd.f32 %v242, %v247
    %v252 = vadd.f32 %v243, %v247
    %v253 = vmul.f32 %v249, %v249
    %v254 = vmul.f32 %v250, %v250
    %v255 = vmul.f32 %v251, %v251
    %v256 = vmul.f32 %v252, %v252
    %v257 = vmul.f32 %v253, 0.044715
    %v258 = vmul.f32 %v254, 0.044715
    %v259 = vmul.f32 %v255, 0.044715
    %v260 = vmul.f32 %v256, 0.044715
    %v261 = vadd.f32 %v257, 1.0
    %v262 = vadd.f32 %v258, 1.0
    %v263 = vadd.f32 %v259, 1.0
    %v264 = vadd.f32 %v260, 1.0
    %v265 = vmul.f32 %v249, %v261
    %v266 = vmul.f32 %v250, %v262
    %v267 = vmul.f32 %v251, %v263
    %v268 = vmul.f32 %v252, %v264
    %v269 = vmul.f32 %v265, 0.7978846
    %v270 = vmul.f32 %v266, 0.7978846
    %v271 = vmul.f32 %v267, 0.7978846
    %v272 = vmul.f32 %v268, 0.7978846
    %v273 = vmul.f32 %v249, 0.5
    %v274 = vmul.f32 %v250, 0.5
    %v275 = vmul.f32 %v251, 0.5
    %v276 = vmul.f32 %v252, 0.5
    %v277 = vtanh.pop %v269
    %v278 = vtanh.pop %v270
    %v279 = vtanh.pop %v271
    %v280 = vtanh.pop %v272
    %v281 = vadd.f32 %v277, 1.0
    %v282 = vadd.f32 %v278, 1.0
    %v283 = vadd.f32 %v279, 1.0
    %v284 = vadd.f32 %v280, 1.0
    %v285 = vmul.f32 %v273, %v281
    %v286 = vmul.f32 %v274, %v282
    %v287 = vmul.f32 %v275, %v283
    %v288 = vmul.f32 %v276, %v284
    %289 = vst [vmem:[#allocation5] sm:$0xff] %v285
    %290 = vst [vmem:[#allocation5 + $0x8] sm:$0xff] %v286
    %291 = vst [vmem:[#allocation5 + $0x10] sm:$0xff] %v287
    %292 = vst [vmem:[#allocation5 + $0x18] sm:$0xff] %v288
    // Predicated region
    $region18: #{tpu_custom_call.1} parent=1 // pred_check
      _
    $region19: #{tpu_custom_call.1} parent=1 // pred_check_branch
      %294 = sbr.rel (0) target = $region21
    $region20: #{tpu_custom_call.1} parent=1 // pred_region
      %s296 = ssub.s32 512, 512
      %297 = vsyncadd [#allocation4], %s296
      %s299 = sshll.u32 [#allocation5], 4
      %s300 = int_to_ptr.vmem [resolvable:$true] %s299
      %302 = dma.vmem_to_hbm [thread:$0]  %s300, 512, %s3, [#allocation4]
    $region21: #{tpu_custom_call.1} parent=1 // pred_fallthru
      _
    // Predicated region
    $region22: #{tpu_custom_call.1} parent=1 // pred_check
      _
    $region23: #{tpu_custom_call.1} parent=1 // pred_check_branch
      %304 = sbr.rel (0) target = $region25
    $region24: #{tpu_custom_call.1} parent=1 // pred_region
      %305 = dma.done [#allocation4], 512
    $region25: #{tpu_custom_call.1} parent=1 // pred_fallthru
      _
    %306 = vsyncpa [#allocation3], 1
    %307 = vsyncpa [#allocation4], 1

</llo_original>
